<compile_context>
chip_gen: v5e
topology: v5e:2x2
jax: 0.10.0
libtpu: 0.0.40
codegen_flags: <defaults>
</compile_context>

<pallas_src>
import jax
import jax.numpy as jnp
from jax import lax
from jax.experimental import pallas as pl
from jax.experimental.pallas import tpu as pltpu


# ----------------------------- fused Pallas kernel -----------------------------

def _encoder_kernel(x_ref, w1_ref, b1_ref, a1_ref,
                    w2_ref, b2_ref, a2_ref,
                    w3_ref, b3_ref, a3_ref,
                    w4_ref, b4_ref, o_ref):
    # x_ref : [Cin, 16*tn] -- lanes ordered (g, p), g = (kh*2+kw)*4 + (si*2+sj)
    # w1    : [Cin, Cin]   -- 1x1 conv (out, in)
    # w2    : [4, nlc, Cin]-- 2x2/s2 conv, per kernel position k = kh*2+kw
    # w3    : [4, noc, nlc]-- 2x2/s2 conv, per kernel position sb = si*2+sj
    # w4    : [noc, noc]   -- 1x1 conv (out, in)
    # o_ref : [noc, tn]    -- lane-dense output tile
    tn = o_ref.shape[-1]

    # ---- layer 1: 1x1 conv + PReLU over ALL 16 patch groups in one matmul ----
    h1 = jnp.dot(w1_ref[...], x_ref[...],
                 preferred_element_type=jnp.float32) + b1_ref[...]
    h1 = jnp.where(h1 > 0, h1, h1 * a1_ref[...])                 # [Cin, 16*tn]

    # ---- layer 2: 2x2/s2 conv (4 lane-aligned static slices, one per k) ----
    acc2 = jnp.dot(w2_ref[0], h1[:, :4 * tn],
                   preferred_element_type=jnp.float32)
    for k in range(1, 4):
        acc2 = acc2 + jnp.dot(w2_ref[k], h1[:, k * 4 * tn:(k + 1) * 4 * tn],
                              preferred_element_type=jnp.float32)
    h2 = acc2 + b2_ref[...]                                       # [nlc, 4*tn]
    h2 = jnp.where(h2 > 0, h2, h2 * a2_ref[...])

    # ---- layer 3: 2x2/s2 conv (4 lane-aligned static slices, one per sb) ----
    acc3 = jnp.dot(w3_ref[0], h2[:, :tn],
                   preferred_element_type=jnp.float32)
    for sb in range(1, 4):
        acc3 = acc3 + jnp.dot(w3_ref[sb], h2[:, sb * tn:(sb + 1) * tn],
                              preferred_element_type=jnp.float32)
    h3 = acc3 + b3_ref[...]                                       # [noc, tn]
    h3 = jnp.where(h3 > 0, h3, h3 * a3_ref[...])

    # ---- layer 4: 1x1 conv (no activation) ----
    o_ref[...] = jnp.dot(w4_ref[...], h3,
                         preferred_element_type=jnp.float32) + b4_ref[...]


# ------------------------------ host glue ---------------------------------

def _to_patch_groups(x_nchw):
    """[B,C,H,W] -> [C, 16, B*(H/4)*(W/4)].

    Group ordering g = (kh*2+kw)*4 + (si*2+sj): input pixel
    (4i + 2*si + kh, 4j + 2*sj + kw) of final output pixel (i, j), where
    (kh,kw) is the layer-2 kernel offset and (si,sj) the layer-3 offset."""
    B, C, H, W = x_nchw.shape
    Hq, Wq = H // 4, W // 4
    x = x_nchw.reshape(B, C, Hq, 2, 2, Wq, 2, 2)     # (B,C,i,si,kh,j,sj,kw)
    x = x.transpose(1, 4, 7, 3, 6, 0, 2, 5)          # (C,kh,kw,si,sj,B,i,j)
    return x.reshape(C, 16, B * Hq * Wq)


def hyper_encoder_pallas(x_nchw, p, *, tn_max=512):
    B, Cin, H, W = x_nchw.shape
    Hq, Wq = H // 4, W // 4
    nlc = p["b2"].shape[0]
    noc = p["b3"].shape[0]

    # crop to multiples of 4 (matches VALID conv chain semantics exactly)
    if (H % 4) or (W % 4):
        x_nchw = x_nchw[:, :, : Hq * 4, : Wq * 4]

    xp = _to_patch_groups(x_nchw)                    # [Cin, 16, Np]
    Np = xp.shape[-1]

    # lane tile: multiple of 128, at most tn_max; pad pixel axis with zeros
    np128 = ((Np + 127) // 128) * 128
    tn = min(tn_max, np128)
    n_tiles = (Np + tn - 1) // tn
    np_pad = n_tiles * tn
    if np_pad != Np:
        xp = jnp.pad(xp, ((0, 0), (0, 0), (0, np_pad - Np)))

    # per-tile lane layout (group-major, pixel-minor) so layer 1 is one matmul
    xp = (xp.reshape(Cin, 16, n_tiles, tn)
            .transpose(0, 2, 1, 3)
            .reshape(Cin, n_tiles * 16 * tn))

    # weight prep (out-major so the kernel does W @ X with pixels on lanes)
    w1 = p["w1"].T                                               # [Cin, Cin]
    w2 = jnp.transpose(p["w2"], (0, 1, 3, 2)).reshape(4, nlc, Cin)
    w3 = jnp.transpose(p["w3"], (0, 1, 3, 2)).reshape(4, noc, nlc)
    w4 = p["w4"].T                                               # [noc, noc]
    b1 = p["b1"].reshape(Cin, 1)
    a1 = p["a1"].reshape(Cin, 1)
    b2 = p["b2"].reshape(nlc, 1)
    a2 = p["a2"].reshape(nlc, 1)
    b3 = p["b3"].reshape(noc, 1)
    a3 = p["a3"].reshape(noc, 1)
    b4 = p["b4"].reshape(noc, 1)

    full2d = lambda i: (0, 0)
    full3d = lambda i: (0, 0, 0)

    out = pl.pallas_call(
        _encoder_kernel,
        grid=(n_tiles,),
        in_specs=[
            pl.BlockSpec((Cin, 16 * tn), lambda i: (0, i)),
            pl.BlockSpec((Cin, Cin), full2d),
            pl.BlockSpec((Cin, 1), full2d),
            pl.BlockSpec((Cin, 1), full2d),
            pl.BlockSpec((4, nlc, Cin), full3d),
            pl.BlockSpec((nlc, 1), full2d),
            pl.BlockSpec((nlc, 1), full2d),
            pl.BlockSpec((4, noc, nlc), full3d),
            pl.BlockSpec((noc, 1), full2d),
            pl.BlockSpec((noc, 1), full2d),
            pl.BlockSpec((noc, noc), full2d),
            pl.BlockSpec((noc, 1), full2d),
        ],
        out_specs=pl.BlockSpec((noc, tn), lambda i: (0, i)),
        out_shape=jax.ShapeDtypeStruct((noc, np_pad), jnp.float32),
        compiler_params=pltpu.CompilerParams(
            dimension_semantics=("parallel",)),
    )(xp, w1, b1, a1, w2, b2, a2, w3, b3, a3, w4, b4)

    out = out[:, :Np].reshape(noc, B, Hq, Wq)
    return jnp.transpose(out, (1, 0, 2, 3))          # NCHW


# --------------------- deterministic parameter init -----------------------

def init_params(key, nic, nlc, noc):
    ks = jax.random.split(key, 8)

    def u(k, shape, fan_in):
        bound = 1.0 / float(fan_in) ** 0.5
        return jax.random.uniform(k, shape, jnp.float32, -bound, bound)

    return {
        # 1x1 conv stored as [Cin, Cout]
        "w1": u(ks[0], (nic, nic), nic),
        "b1": u(ks[1], (nic,), nic),
        "a1": jnp.full((nic,), 0.25, jnp.float32),
        # 2x2 conv stored as [kh, kw, Cin, Cout]
        "w2": u(ks[2], (2, 2, nic, nlc), 4 * nic),
        "b2": u(ks[3], (nlc,), 4 * nic),
        "a2": jnp.full((nlc,), 0.25, jnp.float32),
        "w3": u(ks[4], (2, 2, nlc, noc), 4 * nlc),
        "b3": u(ks[5], (noc,), 4 * nlc),
        "a3": jnp.full((noc,), 0.25, jnp.float32),
        "w4": u(ks[6], (noc, noc), noc),
        "b4": u(ks[7], (noc,), noc),
    }


# ----------------------- pure-JAX reference (conv) ------------------------

def hyper_encoder_ref(x_nchw, p):
    def conv(x, w_hwio, b, stride):
        w = jnp.transpose(w_hwio, (3, 2, 0, 1))  # -> OIHW
        y = lax.conv_general_dilated(
            x, w, (stride, stride), "VALID",
            dimension_numbers=("NCHW", "OIHW", "NCHW"))
        return y + b.reshape(1, -1, 1, 1)

    def prelu(x, a):
        return jnp.where(x > 0, x, x * a.reshape(1, -1, 1, 1))

    nic = p["b1"].shape[0]
    noc = p["b3"].shape[0]
    h = prelu(conv(x_nchw, p["w1"].reshape(1, 1, nic, nic), p["b1"], 1), p["a1"])
    h = prelu(conv(h, p["w2"], p["b2"], 2), p["a2"])
    h = prelu(conv(h, p["w3"], p["b3"], 2), p["a3"])
    h = conv(h, p["w4"].reshape(1, 1, noc, noc), p["b4"], 1)
    return h


# --------------------------------- main ------------------------------------

if __name__ == "__main__":
    B, nic, nlc, noc = 2, 4, 8, 8
    H = W = 16

    key = jax.random.PRNGKey(0)
    kx, kp = jax.random.split(key)
    x = jax.random.normal(kx, (B, nic, H, W), jnp.float32)
    params = init_params(kp, nic, nlc, noc)

    fwd = jax.jit(hyper_encoder_pallas)
    out = jax.block_until_ready(fwd(x, params))

    ref = jax.block_until_ready(hyper_encoder_ref(x, params))
    assert out.shape == (B, noc, H // 4, W // 4), out.shape
    assert jnp.allclose(out, ref, atol=1e-4, rtol=1e-4), \
        float(jnp.max(jnp.abs(out - ref)))

    print("KERNEL_OK")
</pallas_src>

<mosaic_0001>
module attributes {stable_mosaic.version = 11 : i64} {
  func.func @_encoder_kernel(%arg0: i32, %arg1: memref<4x2048xf32, #tpu.memory_space<vmem>>, %arg2: memref<4x4xf32, #tpu.memory_space<vmem>>, %arg3: memref<4x1xf32, #tpu.memory_space<vmem>>, %arg4: memref<4x1xf32, #tpu.memory_space<vmem>>, %arg5: memref<4x8x4xf32, #tpu.memory_space<vmem>>, %arg6: memref<8x1xf32, #tpu.memory_space<vmem>>, %arg7: memref<8x1xf32, #tpu.memory_space<vmem>>, %arg8: memref<4x8x8xf32, #tpu.memory_space<vmem>>, %arg9: memref<8x1xf32, #tpu.memory_space<vmem>>, %arg10: memref<8x1xf32, #tpu.memory_space<vmem>>, %arg11: memref<8x8xf32, #tpu.memory_space<vmem>>, %arg12: memref<8x1xf32, #tpu.memory_space<vmem>>, %arg13: memref<8x128xf32, #tpu.memory_space<vmem>>) attributes {dimension_semantics = [#tpu.dimension_semantics<parallel>], iteration_bounds = array<i64: 1>, scalar_prefetch = 0 : i64, scratch_operands = 0 : i64, tpu.core_type = #tpu.core_type<tc>, window_params = [{transform_indices = @transform_0, window_bounds = array<i64: 4, 2048>}, {pipeline_mode = #tpu.pipeline_mode<synchronous>, transform_indices = @transform_1, window_bounds = array<i64: 4, 4>}, {pipeline_mode = #tpu.pipeline_mode<synchronous>, transform_indices = @transform_2, window_bounds = array<i64: 4, 1>}, {pipeline_mode = #tpu.pipeline_mode<synchronous>, transform_indices = @transform_3, window_bounds = array<i64: 4, 1>}, {pipeline_mode = #tpu.pipeline_mode<synchronous>, transform_indices = @transform_4, window_bounds = array<i64: 4, 8, 4>}, {pipeline_mode = #tpu.pipeline_mode<synchronous>, transform_indices = @transform_5, window_bounds = array<i64: 8, 1>}, {pipeline_mode = #tpu.pipeline_mode<synchronous>, transform_indices = @transform_6, window_bounds = array<i64: 8, 1>}, {pipeline_mode = #tpu.pipeline_mode<synchronous>, transform_indices = @transform_7, window_bounds = array<i64: 4, 8, 8>}, {pipeline_mode = #tpu.pipeline_mode<synchronous>, transform_indices = @transform_8, window_bounds = array<i64: 8, 1>}, {pipeline_mode = #tpu.pipeline_mode<synchronous>, transform_indices = @transform_9, window_bounds = array<i64: 8, 1>}, {pipeline_mode = #tpu.pipeline_mode<synchronous>, transform_indices = @transform_10, window_bounds = array<i64: 8, 8>}, {pipeline_mode = #tpu.pipeline_mode<synchronous>, transform_indices = @transform_11, window_bounds = array<i64: 8, 1>}, {transform_indices = @transform_12, window_bounds = array<i64: 8, 128>}]} {
    %c0 = arith.constant 0 : index
    %c0_0 = arith.constant 0 : index
    %0 = vector.load %arg2[%c0, %c0_0] : memref<4x4xf32, #tpu.memory_space<vmem>>, vector<4x4xf32>
    %c0_1 = arith.constant 0 : index
    %c0_2 = arith.constant 0 : index
    %1 = vector.load %arg1[%c0_1, %c0_2] : memref<4x2048xf32, #tpu.memory_space<vmem>>, vector<4x2048xf32>
    %cst = arith.constant dense<0.000000e+00> : vector<4x2048xf32>
    %2 = tpu.matmul %0, %1, %cst {dimension_numbers = #tpu.dot_dimension_numbers<[1], [0], [0], [1], [0, 0, 1, 1], [], []>} : vector<4x4xf32>, vector<4x2048xf32>, vector<4x2048xf32> -> vector<4x2048xf32>
    %c0_3 = arith.constant 0 : index
    %c0_4 = arith.constant 0 : index
    %3 = vector.load %arg3[%c0_3, %c0_4] : memref<4x1xf32, #tpu.memory_space<vmem>>, vector<4x1xf32>
    %4 = vector.broadcast %3 : vector<4x1xf32> to vector<4x2048xf32>
    %5 = arith.addf %2, %4 : vector<4x2048xf32>
    %cst_5 = arith.constant 0.000000e+00 : f32
    %6 = vector.broadcast %cst_5 : f32 to vector<4x2048xf32>
    %7 = arith.cmpf ogt, %5, %6 : vector<4x2048xf32>
    %c0_6 = arith.constant 0 : index
    %c0_7 = arith.constant 0 : index
    %8 = vector.load %arg4[%c0_6, %c0_7] : memref<4x1xf32, #tpu.memory_space<vmem>>, vector<4x1xf32>
    %9 = vector.broadcast %8 : vector<4x1xf32> to vector<4x2048xf32>
    %10 = arith.mulf %5, %9 : vector<4x2048xf32>
    %11 = arith.select %7, %5, %10 : vector<4x2048xi1>, vector<4x2048xf32>
    %c0_8 = arith.constant 0 : index
    %c0_9 = arith.constant 0 : index
    %c0_10 = arith.constant 0 : index
    %12 = vector.load %arg5[%c0_8, %c0_9, %c0_10] : memref<4x8x4xf32, #tpu.memory_space<vmem>>, vector<1x8x4xf32>
    %13 = vector.shape_cast %12 : vector<1x8x4xf32> to vector<8x4xf32>
    %14 = vector.extract_strided_slice %11 {offsets = [0, 0], sizes = [4, 512], strides = [1, 1]} : vector<4x2048xf32> to vector<4x512xf32>
    %cst_11 = arith.constant dense<0.000000e+00> : vector<8x512xf32>
    %15 = tpu.matmul %13, %14, %cst_11 {dimension_numbers = #tpu.dot_dimension_numbers<[1], [0], [0], [1], [0, 0, 1, 1], [], []>} : vector<8x4xf32>, vector<4x512xf32>, vector<8x512xf32> -> vector<8x512xf32>
    %c1 = arith.constant 1 : index
    %c0_12 = arith.constant 0 : index
    %c0_13 = arith.constant 0 : index
    %16 = vector.load %arg5[%c1, %c0_12, %c0_13] : memref<4x8x4xf32, #tpu.memory_space<vmem>>, vector<1x8x4xf32>
    %17 = vector.shape_cast %16 : vector<1x8x4xf32> to vector<8x4xf32>
    %18 = vector.extract_strided_slice %11 {offsets = [0, 512], sizes = [4, 512], strides = [1, 1]} : vector<4x2048xf32> to vector<4x512xf32>
    %cst_14 = arith.constant dense<0.000000e+00> : vector<8x512xf32>
    %19 = tpu.matmul %17, %18, %cst_14 {dimension_numbers = #tpu.dot_dimension_numbers<[1], [0], [0], [1], [0, 0, 1, 1], [], []>} : vector<8x4xf32>, vector<4x512xf32>, vector<8x512xf32> -> vector<8x512xf32>
    %20 = arith.addf %15, %19 : vector<8x512xf32>
    %c2 = arith.constant 2 : index
    %c0_15 = arith.constant 0 : index
    %c0_16 = arith.constant 0 : index
    %21 = vector.load %arg5[%c2, %c0_15, %c0_16] : memref<4x8x4xf32, #tpu.memory_space<vmem>>, vector<1x8x4xf32>
    %22 = vector.shape_cast %21 : vector<1x8x4xf32> to vector<8x4xf32>
    %23 = vector.extract_strided_slice %11 {offsets = [0, 1024], sizes = [4, 512], strides = [1, 1]} : vector<4x2048xf32> to vector<4x512xf32>
    %cst_17 = arith.constant dense<0.000000e+00> : vector<8x512xf32>
    %24 = tpu.matmul %22, %23, %cst_17 {dimension_numbers = #tpu.dot_dimension_numbers<[1], [0], [0], [1], [0, 0, 1, 1], [], []>} : vector<8x4xf32>, vector<4x512xf32>, vector<8x512xf32> -> vector<8x512xf32>
    %25 = arith.addf %20, %24 : vector<8x512xf32>
    %c3 = arith.constant 3 : index
    %c0_18 = arith.constant 0 : index
    %c0_19 = arith.constant 0 : index
    %26 = vector.load %arg5[%c3, %c0_18, %c0_19] : memref<4x8x4xf32, #tpu.memory_space<vmem>>, vector<1x8x4xf32>
    %27 = vector.shape_cast %26 : vector<1x8x4xf32> to vector<8x4xf32>
    %28 = vector.extract_strided_slice %11 {offsets = [0, 1536], sizes = [4, 512], strides = [1, 1]} : vector<4x2048xf32> to vector<4x512xf32>
    %cst_20 = arith.constant dense<0.000000e+00> : vector<8x512xf32>
    %29 = tpu.matmul %27, %28, %cst_20 {dimension_numbers = #tpu.dot_dimension_numbers<[1], [0], [0], [1], [0, 0, 1, 1], [], []>} : vector<8x4xf32>, vector<4x512xf32>, vector<8x512xf32> -> vector<8x512xf32>
    %30 = arith.addf %25, %29 : vector<8x512xf32>
    %c0_21 = arith.constant 0 : index
    %c0_22 = arith.constant 0 : index
    %31 = vector.load %arg6[%c0_21, %c0_22] : memref<8x1xf32, #tpu.memory_space<vmem>>, vector<8x1xf32>
    %32 = vector.broadcast %31 : vector<8x1xf32> to vector<8x512xf32>
    %33 = arith.addf %30, %32 : vector<8x512xf32>
    %cst_23 = arith.constant 0.000000e+00 : f32
    %34 = vector.broadcast %cst_23 : f32 to vector<8x512xf32>
    %35 = arith.cmpf ogt, %33, %34 : vector<8x512xf32>
    %c0_24 = arith.constant 0 : index
    %c0_25 = arith.constant 0 : index
    %36 = vector.load %arg7[%c0_24, %c0_25] : memref<8x1xf32, #tpu.memory_space<vmem>>, vector<8x1xf32>
    %37 = vector.broadcast %36 : vector<8x1xf32> to vector<8x512xf32>
    %38 = arith.mulf %33, %37 : vector<8x512xf32>
    %39 = arith.select %35, %33, %38 : vector<8x512xi1>, vector<8x512xf32>
    %c0_26 = arith.constant 0 : index
    %c0_27 = arith.constant 0 : index
    %c0_28 = arith.constant 0 : index
    %40 = vector.load %arg8[%c0_26, %c0_27, %c0_28] : memref<4x8x8xf32, #tpu.memory_space<vmem>>, vector<1x8x8xf32>
    %41 = vector.shape_cast %40 : vector<1x8x8xf32> to vector<8x8xf32>
    %42 = vector.extract_strided_slice %39 {offsets = [0, 0], sizes = [8, 128], strides = [1, 1]} : vector<8x512xf32> to vector<8x128xf32>
    %cst_29 = arith.constant dense<0.000000e+00> : vector<8x128xf32>
    %43 = tpu.matmul %41, %42, %cst_29 {dimension_numbers = #tpu.dot_dimension_numbers<[1], [0], [0], [1], [0, 0, 1, 1], [], []>} : vector<8x8xf32>, vector<8x128xf32>, vector<8x128xf32> -> vector<8x128xf32>
    %c1_30 = arith.constant 1 : index
    %c0_31 = arith.constant 0 : index
    %c0_32 = arith.constant 0 : index
    %44 = vector.load %arg8[%c1_30, %c0_31, %c0_32] : memref<4x8x8xf32, #tpu.memory_space<vmem>>, vector<1x8x8xf32>
    %45 = vector.shape_cast %44 : vector<1x8x8xf32> to vector<8x8xf32>
    %46 = vector.extract_strided_slice %39 {offsets = [0, 128], sizes = [8, 128], strides = [1, 1]} : vector<8x512xf32> to vector<8x128xf32>
    %cst_33 = arith.constant dense<0.000000e+00> : vector<8x128xf32>
    %47 = tpu.matmul %45, %46, %cst_33 {dimension_numbers = #tpu.dot_dimension_numbers<[1], [0], [0], [1], [0, 0, 1, 1], [], []>} : vector<8x8xf32>, vector<8x128xf32>, vector<8x128xf32> -> vector<8x128xf32>
    %48 = arith.addf %43, %47 : vector<8x128xf32>
    %c2_34 = arith.constant 2 : index
    %c0_35 = arith.constant 0 : index
    %c0_36 = arith.constant 0 : index
    %49 = vector.load %arg8[%c2_34, %c0_35, %c0_36] : memref<4x8x8xf32, #tpu.memory_space<vmem>>, vector<1x8x8xf32>
    %50 = vector.shape_cast %49 : vector<1x8x8xf32> to vector<8x8xf32>
    %51 = vector.extract_strided_slice %39 {offsets = [0, 256], sizes = [8, 128], strides = [1, 1]} : vector<8x512xf32> to vector<8x128xf32>
    %cst_37 = arith.constant dense<0.000000e+00> : vector<8x128xf32>
    %52 = tpu.matmul %50, %51, %cst_37 {dimension_numbers = #tpu.dot_dimension_numbers<[1], [0], [0], [1], [0, 0, 1, 1], [], []>} : vector<8x8xf32>, vector<8x128xf32>, vector<8x128xf32> -> vector<8x128xf32>
    %53 = arith.addf %48, %52 : vector<8x128xf32>
    %c3_38 = arith.constant 3 : index
    %c0_39 = arith.constant 0 : index
    %c0_40 = arith.constant 0 : index
    %54 = vector.load %arg8[%c3_38, %c0_39, %c0_40] : memref<4x8x8xf32, #tpu.memory_space<vmem>>, vector<1x8x8xf32>
    %55 = vector.shape_cast %54 : vector<1x8x8xf32> to vector<8x8xf32>
    %56 = vector.extract_strided_slice %39 {offsets = [0, 384], sizes = [8, 128], strides = [1, 1]} : vector<8x512xf32> to vector<8x128xf32>
    %cst_41 = arith.constant dense<0.000000e+00> : vector<8x128xf32>
    %57 = tpu.matmul %55, %56, %cst_41 {dimension_numbers = #tpu.dot_dimension_numbers<[1], [0], [0], [1], [0, 0, 1, 1], [], []>} : vector<8x8xf32>, vector<8x128xf32>, vector<8x128xf32> -> vector<8x128xf32>
    %58 = arith.addf %53, %57 : vector<8x128xf32>
    %c0_42 = arith.constant 0 : index
    %c0_43 = arith.constant 0 : index
    %59 = vector.load %arg9[%c0_42, %c0_43] : memref<8x1xf32, #tpu.memory_space<vmem>>, vector<8x1xf32>
    %60 = vector.broadcast %59 : vector<8x1xf32> to vector<8x128xf32>
    %61 = arith.addf %58, %60 : vector<8x128xf32>
    %cst_44 = arith.constant 0.000000e+00 : f32
    %62 = vector.broadcast %cst_44 : f32 to vector<8x128xf32>
    %63 = arith.cmpf ogt, %61, %62 : vector<8x128xf32>
    %c0_45 = arith.constant 0 : index
    %c0_46 = arith.constant 0 : index
    %64 = vector.load %arg10[%c0_45, %c0_46] : memref<8x1xf32, #tpu.memory_space<vmem>>, vector<8x1xf32>
    %65 = vector.broadcast %64 : vector<8x1xf32> to vector<8x128xf32>
    %66 = arith.mulf %61, %65 : vector<8x128xf32>
    %67 = arith.select %63, %61, %66 : vector<8x128xi1>, vector<8x128xf32>
    %c0_47 = arith.constant 0 : index
    %c0_48 = arith.constant 0 : index
    %68 = vector.load %arg11[%c0_47, %c0_48] : memref<8x8xf32, #tpu.memory_space<vmem>>, vector<8x8xf32>
    %cst_49 = arith.constant dense<0.000000e+00> : vector<8x128xf32>
    %69 = tpu.matmul %68, %67, %cst_49 {dimension_numbers = #tpu.dot_dimension_numbers<[1], [0], [0], [1], [0, 0, 1, 1], [], []>} : vector<8x8xf32>, vector<8x128xf32>, vector<8x128xf32> -> vector<8x128xf32>
    %c0_50 = arith.constant 0 : index
    %c0_51 = arith.constant 0 : index
    %70 = vector.load %arg12[%c0_50, %c0_51] : memref<8x1xf32, #tpu.memory_space<vmem>>, vector<8x1xf32>
    %71 = vector.broadcast %70 : vector<8x1xf32> to vector<8x128xf32>
    %72 = arith.addf %69, %71 : vector<8x128xf32>
    %c0_52 = arith.constant 0 : index
    %c0_53 = arith.constant 0 : index
    %73 = vector.load %arg13[%c0_52, %c0_53] : memref<8x128xf32, #tpu.memory_space<vmem>>, vector<8x128xf32>
    tpu.vector_store %arg13[%c0_52, %c0_53], %72 {strides = array<i32>} : memref<8x128xf32, #tpu.memory_space<vmem>>, vector<8x128xf32>,
    return
  }
  func.func @transform_0(%arg0: i32) -> (i32, i32) {
    %c0_i32 = arith.constant 0 : i32
    %c0_i32_0 = arith.constant 0 : i32
    return %c0_i32, %arg0 : i32, i32
  }
  func.func @transform_1(%arg0: i32) -> (i32, i32) {
    %c0_i32 = arith.constant 0 : i32
    %c0_i32_0 = arith.constant 0 : i32
    %c0_i32_1 = arith.constant 0 : i32
    return %c0_i32, %c0_i32_0 : i32, i32
  }
  func.func @transform_2(%arg0: i32) -> (i32, i32) {
    %c0_i32 = arith.constant 0 : i32
    %c0_i32_0 = arith.constant 0 : i32
    %c0_i32_1 = arith.constant 0 : i32
    return %c0_i32, %c0_i32_0 : i32, i32
  }
  func.func @transform_3(%arg0: i32) -> (i32, i32) {
    %c0_i32 = arith.constant 0 : i32
    %c0_i32_0 = arith.constant 0 : i32
    %c0_i32_1 = arith.constant 0 : i32
    return %c0_i32, %c0_i32_0 : i32, i32
  }
  func.func @transform_4(%arg0: i32) -> (i32, i32, i32) {
    %c0_i32 = arith.constant 0 : i32
    %c0_i32_0 = arith.constant 0 : i32
    %c0_i32_1 = arith.constant 0 : i32
    %c0_i32_2 = arith.constant 0 : i32
    return %c0_i32, %c0_i32_0, %c0_i32_1 : i32, i32, i32
  }
  func.func @transform_5(%arg0: i32) -> (i32, i32) {
    %c0_i32 = arith.constant 0 : i32
    %c0_i32_0 = arith.constant 0 : i32
    %c0_i32_1 = arith.constant 0 : i32
    return %c0_i32, %c0_i32_0 : i32, i32
  }
  func.func @transform_6(%arg0: i32) -> (i32, i32) {
    %c0_i32 = arith.constant 0 : i32
    %c0_i32_0 = arith.constant 0 : i32
    %c0_i32_1 = arith.constant 0 : i32
    return %c0_i32, %c0_i32_0 : i32, i32
  }
  func.func @transform_7(%arg0: i32) -> (i32, i32, i32) {
    %c0_i32 = arith.constant 0 : i32
    %c0_i32_0 = arith.constant 0 : i32
    %c0_i32_1 = arith.constant 0 : i32
    %c0_i32_2 = arith.constant 0 : i32
    return %c0_i32, %c0_i32_0, %c0_i32_1 : i32, i32, i32
  }
  func.func @transform_8(%arg0: i32) -> (i32, i32) {
    %c0_i32 = arith.constant 0 : i32
    %c0_i32_0 = arith.constant 0 : i32
    %c0_i32_1 = arith.constant 0 : i32
    return %c0_i32, %c0_i32_0 : i32, i32
  }
  func.func @transform_9(%arg0: i32) -> (i32, i32) {
    %c0_i32 = arith.constant 0 : i32
    %c0_i32_0 = arith.constant 0 : i32
    %c0_i32_1 = arith.constant 0 : i32
    return %c0_i32, %c0_i32_0 : i32, i32
  }
  func.func @transform_10(%arg0: i32) -> (i32, i32) {
    %c0_i32 = arith.constant 0 : i32
    %c0_i32_0 = arith.constant 0 : i32
    %c0_i32_1 = arith.constant 0 : i32
    return %c0_i32, %c0_i32_0 : i32, i32
  }
  func.func @transform_11(%arg0: i32) -> (i32, i32) {
    %c0_i32 = arith.constant 0 : i32
    %c0_i32_0 = arith.constant 0 : i32
    %c0_i32_1 = arith.constant 0 : i32
    return %c0_i32, %c0_i32_0 : i32, i32
  }
  func.func @transform_12(%arg0: i32) -> (i32, i32) {
    %c0_i32 = arith.constant 0 : i32
    %c0_i32_0 = arith.constant 0 : i32
    return %c0_i32, %arg0 : i32, i32
  }
}

</mosaic_0001>

<llo_original>
// kernel: hyper_encoder_pallas.1
$region0: #{hyper_encoder_pallas.1}
  #allocation0 [shape = 'u32[]', space=smem, size = 0x4, offset = 0x4, fixed_abs, tag = 'smem constant byte address 0x4 - core index']
  #allocation1 [shape = 'u32[72,128]{1,0:T(1,128)}', space=vmem, size = 0x9000, scoped, tag = 'internal scratch']
  %s0 = inlined_call_operand.vmem [shape: f32[4,2048], index: 0, kind: input, shape index: {}]
  %s1 = inlined_call_operand.vmem [shape: f32[4,4], index: 1, kind: input, shape index: {}]
  %s2 = inlined_call_operand.vmem [shape: f32[4,1], index: 2, kind: input, shape index: {}]
  %s3 = inlined_call_operand.vmem [shape: f32[4,1], index: 3, kind: input, shape index: {}]
  %s4 = inlined_call_operand.vmem [shape: f32[4,8,4], index: 4, kind: input, shape index: {}]
  %s5 = inlined_call_operand.vmem [shape: f32[8,1], index: 5, kind: input, shape index: {}]
  %s6 = inlined_call_operand.vmem [shape: f32[8,1], index: 6, kind: input, shape index: {}]
  %s7 = inlined_call_operand.vmem [shape: f32[4,8,8], index: 7, kind: input, shape index: {}]
  %s8 = inlined_call_operand.vmem [shape: f32[8,1], index: 8, kind: input, shape index: {}]
  %s9 = inlined_call_operand.vmem [shape: f32[8,1], index: 9, kind: input, shape index: {}]
  %s10 = inlined_call_operand.vmem [shape: f32[8,8], index: 10, kind: input, shape index: {}]
  %s11 = inlined_call_operand.vmem [shape: f32[8,1], index: 11, kind: input, shape index: {}]
  %s12 = inlined_call_operand.vmem [shape: f32[8,128], index: 12, kind: output, shape index: {}]
  %s13 = sld [smem:[#allocation0]]
  $region58: #{hyper_encoder_pallas.1} parent=0
    _
  %s15 = ssub.s32 1, %s13
  %s16 = scalar_select 0, %s15, %s13
  // Predicated region
  $region2: #{hyper_encoder_pallas.1} parent=0 // pred_check
    _
  $region3: #{hyper_encoder_pallas.1} parent=0 // pred_check_branch
    %18 = sbr.rel (0) target = $region5
  $region4: #{hyper_encoder_pallas.1} parent=0 // pred_region
    _
  $region5: #{hyper_encoder_pallas.1} parent=0 // pred_fallthru
    _
  // Predicated region
  $region6: #{hyper_encoder_pallas.1} parent=0 // pred_check
    _
  $region7: #{hyper_encoder_pallas.1} parent=0 // pred_check_branch
    %20 = sbr.rel (0) target = $region9
  $region8: #{hyper_encoder_pallas.1} parent=0 // pred_region
    _
  $region9: #{hyper_encoder_pallas.1} parent=0 // pred_fallthru
    _
  // Predicated region
  $region10: #{hyper_encoder_pallas.1} parent=0 // pred_check
    _
  $region11: #{hyper_encoder_pallas.1} parent=0 // pred_check_branch
    %22 = sbr.rel (0) target = $region13
  $region12: #{hyper_encoder_pallas.1} parent=0 // pred_region
    _
  $region13: #{hyper_encoder_pallas.1} parent=0 // pred_fallthru
    _
  // Predicated region
  $region14: #{hyper_encoder_pallas.1} parent=0 // pred_check
    _
  $region15: #{hyper_encoder_pallas.1} parent=0 // pred_check_branch
    %24 = sbr.rel (0) target = $region17
  $region16: #{hyper_encoder_pallas.1} parent=0 // pred_region
    _
  $region17: #{hyper_encoder_pallas.1} parent=0 // pred_fallthru
    _
  // Predicated region
  $region18: #{hyper_encoder_pallas.1} parent=0 // pred_check
    _
  $region19: #{hyper_encoder_pallas.1} parent=0 // pred_check_branch
    %26 = sbr.rel (0) target = $region21
  $region20: #{hyper_encoder_pallas.1} parent=0 // pred_region
    _
  $region21: #{hyper_encoder_pallas.1} parent=0 // pred_fallthru
    _
  // Predicated region
  $region22: #{hyper_encoder_pallas.1} parent=0 // pred_check
    _
  $region23: #{hyper_encoder_pallas.1} parent=0 // pred_check_branch
    %28 = sbr.rel (0) target = $region25
  $region24: #{hyper_encoder_pallas.1} parent=0 // pred_region
    _
  $region25: #{hyper_encoder_pallas.1} parent=0 // pred_fallthru
    _
  // Predicated region
  $region26: #{hyper_encoder_pallas.1} parent=0 // pred_check
    _
  $region27: #{hyper_encoder_pallas.1} parent=0 // pred_check_branch
    %30 = sbr.rel (0) target = $region29
  $region28: #{hyper_encoder_pallas.1} parent=0 // pred_region
    _
  $region29: #{hyper_encoder_pallas.1} parent=0 // pred_fallthru
    _
  // Predicated region
  $region30: #{hyper_encoder_pallas.1} parent=0 // pred_check
    _
  $region31: #{hyper_encoder_pallas.1} parent=0 // pred_check_branch
    %32 = sbr.rel (0) target = $region33
  $region32: #{hyper_encoder_pallas.1} parent=0 // pred_region
    _
  $region33: #{hyper_encoder_pallas.1} parent=0 // pred_fallthru
    _
  // Predicated region
  $region34: #{hyper_encoder_pallas.1} parent=0 // pred_check
    _
  $region35: #{hyper_encoder_pallas.1} parent=0 // pred_check_branch
    %34 = sbr.rel (0) target = $region37
  $region36: #{hyper_encoder_pallas.1} parent=0 // pred_region
    _
  $region37: #{hyper_encoder_pallas.1} parent=0 // pred_fallthru
    _
  // Predicated region
  $region38: #{hyper_encoder_pallas.1} parent=0 // pred_check
    _
  $region39: #{hyper_encoder_pallas.1} parent=0 // pred_check_branch
    %36 = sbr.rel (0) target = $region41
  $region40: #{hyper_encoder_pallas.1} parent=0 // pred_region
    _
  $region41: #{hyper_encoder_pallas.1} parent=0 // pred_fallthru
    _
  // Predicated region
  $region42: #{hyper_encoder_pallas.1} parent=0 // pred_check
    _
  $region43: #{hyper_encoder_pallas.1} parent=0 // pred_check_branch
    %38 = sbr.rel (0) target = $region45
  $region44: #{hyper_encoder_pallas.1} parent=0 // pred_region
    _
  $region45: #{hyper_encoder_pallas.1} parent=0 // pred_fallthru
    _
  // Predicated region
  $region46: #{hyper_encoder_pallas.1} parent=0 // pred_check
    _
  $region47: #{hyper_encoder_pallas.1} parent=0 // pred_check_branch
    %40 = sbr.rel (0) target = $region49
  $region48: #{hyper_encoder_pallas.1} parent=0 // pred_region
    _
  $region49: #{hyper_encoder_pallas.1} parent=0 // pred_fallthru
    _
  %v41 = vld [vmem:[%s1] sm:$0xf]
  %v42 = vld [vmem:[%s0] sm:$0xff]
  %v43 = vld [vmem:[%s0 + $0x8] sm:$0xff]
  %v44 = vld [vmem:[%s0 + $0x10] sm:$0xff]
  %v45 = vld [vmem:[%s0 + $0x18] sm:$0xff]
  %v46 = vld [vmem:[%s0 + $0x20] sm:$0xff]
  %v47 = vld [vmem:[%s0 + $0x28] sm:$0xff]
  %v48 = vld [vmem:[%s0 + $0x30] sm:$0xff]
  %v49 = vld [vmem:[%s0 + $0x38] sm:$0xff]
  %v50 = vld [vmem:[%s2] sm:$0xf]
  %52 = vset.pattern.permute.xlu0 0
  %53 = vperm.xlu0 %52, %v50
  %v54 = vpop.permute.xlu0 %53
  %64 = vst [vmem:[#allocation1] ss:$2 sm:$0xff] %v42
  %s65 = scalar_lea.vmem [#allocation1], 16
  %66 = vst [vmem:[%s65] ss:$2 sm:$0xff] %v43
  %s67 = scalar_lea.vmem [#allocation1], 32
  %68 = vst [vmem:[%s67] ss:$2 sm:$0xff] %v44
  %s69 = scalar_lea.vmem [#allocation1], 48
  %70 = vst [vmem:[%s69] ss:$2 sm:$0xff] %v45
  %v71 = vld.sshfl [vmem:[#allocation1] sm:$0xff pattern:$0x75316420]
  %v72 = vld.sshfl [vmem:[#allocation1 + $0x8] sm:$0xff pattern:$0x75316420]
  %v73 = vld.sshfl [vmem:[#allocation1 + $0x10] sm:$0xff pattern:$0x75316420]
  %v74 = vld.sshfl [vmem:[#allocation1 + $0x18] sm:$0xff pattern:$0x75316420]
  %v75 = vld.sshfl [vmem:[#allocation1 + $0x20] sm:$0xff pattern:$0x75316420]
  %v76 = vld.sshfl [vmem:[#allocation1 + $0x28] sm:$0xff pattern:$0x75316420]
  %v77 = vld.sshfl [vmem:[#allocation1 + $0x30] sm:$0xff pattern:$0x75316420]
  %v78 = vld.sshfl [vmem:[#allocation1 + $0x38] sm:$0xff pattern:$0x75316420]
  %79 = vst [vmem:[#allocation1] ss:$2 sm:$0xff] %v46
  %80 = vst [vmem:[%s65] ss:$2 sm:$0xff] %v47
  %81 = vst [vmem:[%s67] ss:$2 sm:$0xff] %v48
  %82 = vst [vmem:[%s69] ss:$2 sm:$0xff] %v49
  %v83 = vld.sshfl [vmem:[#allocation1] sm:$0xff pattern:$0x75316420]
  %v84 = vld.sshfl [vmem:[#allocation1 + $0x8] sm:$0xff pattern:$0x75316420]
  %v85 = vld.sshfl [vmem:[#allocation1 + $0x10] sm:$0xff pattern:$0x75316420]
  %v86 = vld.sshfl [vmem:[#allocation1 + $0x18] sm:$0xff pattern:$0x75316420]
  %v87 = vld.sshfl [vmem:[#allocation1 + $0x20] sm:$0xff pattern:$0x75316420]
  %v88 = vld.sshfl [vmem:[#allocation1 + $0x28] sm:$0xff pattern:$0x75316420]
  %v89 = vld.sshfl [vmem:[#allocation1 + $0x30] sm:$0xff pattern:$0x75316420]
  %v90 = vld.sshfl [vmem:[#allocation1 + $0x38] sm:$0xff pattern:$0x75316420]
  %vm91 = vcmask 31744
  %v93 = vsel %vm91, %v41, 0
  %vm95 = vcmask 1043456
  %v96 = vsel %vm95, %v71, 0
  %v98 = vsel %vm95, %v72, 0
  %v100 = vsel %vm95, %v73, 0
  %v102 = vsel %vm95, %v74, 0
  %v104 = vsel %vm95, %v75, 0
  %v106 = vsel %vm95, %v76, 0
  %v108 = vsel %vm95, %v77, 0
  %v110 = vsel %vm95, %v78, 0
  %v112 = vsel %vm95, %v83, 0
  %v114 = vsel %vm95, %v84, 0
  %v116 = vsel %vm95, %v85, 0
  %v118 = vsel %vm95, %v86, 0
  %v120 = vsel %vm95, %v87, 0
  %v122 = vsel %vm95, %v88, 0
  %v124 = vsel %vm95, %v89, 0
  %v126 = vsel %vm95, %v90, 0
  %128 = vmatpush.msra.mxu0 0.0
  %129 = vmatpush.msra.mxu0 0.0
  %130 = vmatpush.msra.mxu0 0.0
  %131 = vmatpush.msra.mxu0 0.0
  %132 = vmatpush.msra.mxu0 0.0
  %133 = vmatpush.msra.mxu0 0.0
  %134 = vmatpush.msra.mxu0 0.0
  %135 = vmatpush.msra.mxu0 0.0
  %136 = vmatpush.msra.mxu0 0.0
  %137 = vmatpush.msra.mxu0 0.0
  %138 = vmatpush.msra.mxu0 0.0
  %139 = vmatpush.msra.mxu0 0.0
  %140 = vmatpush.msra.mxu0 0.0
  %141 = vmatpush.msra.mxu0 0.0
  %142 = vmatpush.msra.mxu0 0.0
  %143 = vmatpush.msra.mxu0 %v96
  %144 = vmatmul.f32.gmra.mxu0 %v93
  %v145 = vpop.f32.mrf.mxu0
  %v146 = vadd.f32 %v54, %v145
  %147 = vdwg.mxu0
  %148 = vmatpush.msra.mxu0 0.0
  %149 = vmatpush.msra.mxu0 0.0
  %150 = vmatpush.msra.mxu0 0.0
  %151 = vmatpush.msra.mxu0 0.0
  %152 = vmatpush.msra.mxu0 0.0
  %153 = vmatpush.msra.mxu0 0.0
  %154 = vmatpush.msra.mxu0 0.0
  %155 = vmatpush.msra.mxu0 0.0
  %156 = vmatpush.msra.mxu0 0.0
  %157 = vmatpush.msra.mxu0 0.0
  %158 = vmatpush.msra.mxu0 0.0
  %159 = vmatpush.msra.mxu0 0.0
  %160 = vmatpush.msra.mxu0 0.0
  %161 = vmatpush.msra.mxu0 0.0
  %162 = vmatpush.msra.mxu0 0.0
  %163 = vmatpush.msra.mxu0 %v98
  %164 = vmatmul.f32.gmra.mxu0 %v93
  %v165 = vpop.f32.mrf.mxu0
  %v166 = vadd.f32 %v54, %v165
  %167 = vdwg.mxu0
  %168 = vmatpush.msra.mxu0 0.0
  %169 = vmatpush.msra.mxu0 0.0
  %170 = vmatpush.msra.mxu0 0.0
  %171 = vmatpush.msra.mxu0 0.0
  %172 = vmatpush.msra.mxu0 0.0
  %173 = vmatpush.msra.mxu0 0.0
  %174 = vmatpush.msra.mxu0 0.0
  %175 = vmatpush.msra.mxu0 0.0
  %176 = vmatpush.msra.mxu0 0.0
  %177 = vmatpush.msra.mxu0 0.0
  %178 = vmatpush.msra.mxu0 0.0
  %179 = vmatpush.msra.mxu0 0.0
  %180 = vmatpush.msra.mxu0 0.0
  %181 = vmatpush.msra.mxu0 0.0
  %182 = vmatpush.msra.mxu0 0.0
  %183 = vmatpush.msra.mxu0 %v100
  %184 = vmatmul.f32.gmra.mxu0 %v93
  %v185 = vpop.f32.mrf.mxu0
  %v186 = vadd.f32 %v54, %v185
  %187 = vdwg.mxu0
  %188 = vmatpush.msra.mxu0 0.0
  %189 = vmatpush.msra.mxu0 0.0
  %190 = vmatpush.msra.mxu0 0.0
  %191 = vmatpush.msra.mxu0 0.0
  %192 = vmatpush.msra.mxu0 0.0
  %193 = vmatpush.msra.mxu0 0.0
  %194 = vmatpush.msra.mxu0 0.0
  %195 = vmatpush.msra.mxu0 0.0
  %196 = vmatpush.msra.mxu0 0.0
  %197 = vmatpush.msra.mxu0 0.0
  %198 = vmatpush.msra.mxu0 0.0
  %199 = vmatpush.msra.mxu0 0.0
  %200 = vmatpush.msra.mxu0 0.0
  %201 = vmatpush.msra.mxu0 0.0
  %202 = vmatpush.msra.mxu0 0.0
  %203 = vmatpush.msra.mxu0 %v102
  %204 = vmatmul.f32.gmra.mxu0 %v93
  %v205 = vpop.f32.mrf.mxu0
  %v206 = vadd.f32 %v54, %v205
  %207 = vdwg.mxu0
  %208 = vmatpush.msra.mxu0 0.0
  %209 = vmatpush.msra.mxu0 0.0
  %210 = vmatpush.msra.mxu0 0.0
  %211 = vmatpush.msra.mxu0 0.0
  %212 = vmatpush.msra.mxu0 0.0
  %213 = vmatpush.msra.mxu0 0.0
  %214 = vmatpush.msra.mxu0 0.0
  %215 = vmatpush.msra.mxu0 0.0
  %216 = vmatpush.msra.mxu0 0.0
  %217 = vmatpush.msra.mxu0 0.0
  %218 = vmatpush.msra.mxu0 0.0
  %219 = vmatpush.msra.mxu0 0.0
  %220 = vmatpush.msra.mxu0 0.0
  %221 = vmatpush.msra.mxu0 0.0
  %222 = vmatpush.msra.mxu0 0.0
  %223 = vmatpush.msra.mxu0 %v104
  %224 = vmatmul.f32.gmra.mxu0 %v93
  %v225 = vpop.f32.mrf.mxu0
  %v226 = vadd.f32 %v54, %v225
  %227 = vdwg.mxu0
  %228 = vmatpush.msra.mxu0 0.0
  %229 = vmatpush.msra.mxu0 0.0
  %230 = vmatpush.msra.mxu0 0.0
  %231 = vmatpush.msra.mxu0 0.0
  %232 = vmatpush.msra.mxu0 0.0
  %233 = vmatpush.msra.mxu0 0.0
  %234 = vmatpush.msra.mxu0 0.0
  %235 = vmatpush.msra.mxu0 0.0
  %236 = vmatpush.msra.mxu0 0.0
  %237 = vmatpush.msra.mxu0 0.0
  %238 = vmatpush.msra.mxu0 0.0
  %239 = vmatpush.msra.mxu0 0.0
  %240 = vmatpush.msra.mxu0 0.0
  %241 = vmatpush.msra.mxu0 0.0
  %242 = vmatpush.msra.mxu0 0.0
  %243 = vmatpush.msra.mxu0 %v106
  %244 = vmatmul.f32.gmra.mxu0 %v93
  %v245 = vpop.f32.mrf.mxu0
  %v246 = vadd.f32 %v54, %v245
  %247 = vdwg.mxu0
  %248 = vmatpush.msra.mxu0 0.0
  %249 = vmatpush.msra.mxu0 0.0
  %250 = vmatpush.msra.mxu0 0.0
  %251 = vmatpush.msra.mxu0 0.0
  %252 = vmatpush.msra.mxu0 0.0
  %253 = vmatpush.msra.mxu0 0.0
  %254 = vmatpush.msra.mxu0 0.0
  %255 = vmatpush.msra.mxu0 0.0
  %256 = vmatpush.msra.mxu0 0.0
  %257 = vmatpush.msra.mxu0 0.0
  %258 = vmatpush.msra.mxu0 0.0
  %259 = vmatpush.msra.mxu0 0.0
  %260 = vmatpush.msra.mxu0 0.0
  %261 = vmatpush.msra.mxu0 0.0
  %262 = vmatpush.msra.mxu0 0.0
  %263 = vmatpush.msra.mxu0 %v108
  %264 = vmatmul.f32.gmra.mxu0 %v93
  %v265 = vpop.f32.mrf.mxu0
  %v266 = vadd.f32 %v54, %v265
  %267 = vdwg.mxu0
  %268 = vmatpush.msra.mxu0 0.0
  %269 = vmatpush.msra.mxu0 0.0
  %270 = vmatpush.msra.mxu0 0.0
  %271 = vmatpush.msra.mxu0 0.0
  %272 = vmatpush.msra.mxu0 0.0
  %273 = vmatpush.msra.mxu0 0.0
  %274 = vmatpush.msra.mxu0 0.0
  %275 = vmatpush.msra.mxu0 0.0
  %276 = vmatpush.msra.mxu0 0.0
  %277 = vmatpush.msra.mxu0 0.0
  %278 = vmatpush.msra.mxu0 0.0
  %279 = vmatpush.msra.mxu0 0.0
  %280 = vmatpush.msra.mxu0 0.0
  %281 = vmatpush.msra.mxu0 0.0
  %282 = vmatpush.msra.mxu0 0.0
  %283 = vmatpush.msra.mxu0 %v110
  %284 = vmatmul.f32.gmra.mxu0 %v93
  %v285 = vpop.f32.mrf.mxu0
  %v286 = vadd.f32 %v54, %v285
  %287 = vdwg.mxu0
  %288 = vmatpush.msra.mxu0 0.0
  %289 = vmatpush.msra.mxu0 0.0
  %290 = vmatpush.msra.mxu0 0.0
  %291 = vmatpush.msra.mxu0 0.0
  %292 = vmatpush.msra.mxu0 0.0
  %293 = vmatpush.msra.mxu0 0.0
  %294 = vmatpush.msra.mxu0 0.0
  %295 = vmatpush.msra.mxu0 0.0
  %296 = vmatpush.msra.mxu0 0.0
  %297 = vmatpush.msra.mxu0 0.0
  %298 = vmatpush.msra.mxu0 0.0
  %299 = vmatpush.msra.mxu0 0.0
  %300 = vmatpush.msra.mxu0 0.0
  %301 = vmatpush.msra.mxu0 0.0
  %302 = vmatpush.msra.mxu0 0.0
  %303 = vmatpush.msra.mxu0 %v112
  %304 = vmatmul.f32.gmra.mxu0 %v93
  %v305 = vpop.f32.mrf.mxu0
  %v306 = vadd.f32 %v54, %v305
  %307 = vdwg.mxu0
  %308 = vmatpush.msra.mxu0 0.0
  %309 = vmatpush.msra.mxu0 0.0
  %310 = vmatpush.msra.mxu0 0.0
  %311 = vmatpush.msra.mxu0 0.0
  %312 = vmatpush.msra.mxu0 0.0
  %313 = vmatpush.msra.mxu0 0.0
  %314 = vmatpush.msra.mxu0 0.0
  %315 = vmatpush.msra.mxu0 0.0
  %316 = vmatpush.msra.mxu0 0.0
  %317 = vmatpush.msra.mxu0 0.0
  %318 = vmatpush.msra.mxu0 0.0
  %319 = vmatpush.msra.mxu0 0.0
  %320 = vmatpush.msra.mxu0 0.0
  %321 = vmatpush.msra.mxu0 0.0
  %322 = vmatpush.msra.mxu0 0.0
  %323 = vmatpush.msra.mxu0 %v114
  %324 = vmatmul.f32.gmra.mxu0 %v93
  %v325 = vpop.f32.mrf.mxu0
  %v326 = vadd.f32 %v54, %v325
  %327 = vdwg.mxu0
  %328 = vmatpush.msra.mxu0 0.0
  %329 = vmatpush.msra.mxu0 0.0
  %330 = vmatpush.msra.mxu0 0.0
  %331 = vmatpush.msra.mxu0 0.0
  %332 = vmatpush.msra.mxu0 0.0
  %333 = vmatpush.msra.mxu0 0.0
  %334 = vmatpush.msra.mxu0 0.0
  %335 = vmatpush.msra.mxu0 0.0
  %336 = vmatpush.msra.mxu0 0.0
  %337 = vmatpush.msra.mxu0 0.0
  %338 = vmatpush.msra.mxu0 0.0
  %339 = vmatpush.msra.mxu0 0.0
  %340 = vmatpush.msra.mxu0 0.0
  %341 = vmatpush.msra.mxu0 0.0
  %342 = vmatpush.msra.mxu0 0.0
  %343 = vmatpush.msra.mxu0 %v116
  %344 = vmatmul.f32.gmra.mxu0 %v93
  %v345 = vpop.f32.mrf.mxu0
  %v346 = vadd.f32 %v54, %v345
  %347 = vdwg.mxu0
  %348 = vmatpush.msra.mxu0 0.0
  %349 = vmatpush.msra.mxu0 0.0
  %350 = vmatpush.msra.mxu0 0.0
  %351 = vmatpush.msra.mxu0 0.0
  %352 = vmatpush.msra.mxu0 0.0
  %353 = vmatpush.msra.mxu0 0.0
  %354 = vmatpush.msra.mxu0 0.0
  %355 = vmatpush.msra.mxu0 0.0
  %356 = vmatpush.msra.mxu0 0.0
  %357 = vmatpush.msra.mxu0 0.0
  %358 = vmatpush.msra.mxu0 0.0
  %359 = vmatpush.msra.mxu0 0.0
  %360 = vmatpush.msra.mxu0 0.0
  %361 = vmatpush.msra.mxu0 0.0
  %362 = vmatpush.msra.mxu0 0.0
  %363 = vmatpush.msra.mxu0 %v118
  %364 = vmatmul.f32.gmra.mxu0 %v93
  %v365 = vpop.f32.mrf.mxu0
  %v366 = vadd.f32 %v54, %v365
  %367 = vdwg.mxu0
  %368 = vmatpush.msra.mxu0 0.0
  %369 = vmatpush.msra.mxu0 0.0
  %370 = vmatpush.msra.mxu0 0.0
  %371 = vmatpush.msra.mxu0 0.0
  %372 = vmatpush.msra.mxu0 0.0
  %373 = vmatpush.msra.mxu0 0.0
  %374 = vmatpush.msra.mxu0 0.0
  %375 = vmatpush.msra.mxu0 0.0
  %376 = vmatpush.msra.mxu0 0.0
  %377 = vmatpush.msra.mxu0 0.0
  %378 = vmatpush.msra.mxu0 0.0
  %379 = vmatpush.msra.mxu0 0.0
  %380 = vmatpush.msra.mxu0 0.0
  %381 = vmatpush.msra.mxu0 0.0
  %382 = vmatpush.msra.mxu0 0.0
  %383 = vmatpush.msra.mxu0 %v120
  %384 = vmatmul.f32.gmra.mxu0 %v93
  %v385 = vpop.f32.mrf.mxu0
  %v386 = vadd.f32 %v54, %v385
  %387 = vdwg.mxu0
  %388 = vmatpush.msra.mxu0 0.0
  %389 = vmatpush.msra.mxu0 0.0
  %390 = vmatpush.msra.mxu0 0.0
  %391 = vmatpush.msra.mxu0 0.0
  %392 = vmatpush.msra.mxu0 0.0
  %393 = vmatpush.msra.mxu0 0.0
  %394 = vmatpush.msra.mxu0 0.0
  %395 = vmatpush.msra.mxu0 0.0
  %396 = vmatpush.msra.mxu0 0.0
  %397 = vmatpush.msra.mxu0 0.0
  %398 = vmatpush.msra.mxu0 0.0
  %399 = vmatpush.msra.mxu0 0.0
  %400 = vmatpush.msra.mxu0 0.0
  %401 = vmatpush.msra.mxu0 0.0
  %402 = vmatpush.msra.mxu0 0.0
  %403 = vmatpush.msra.mxu0 %v122
  %404 = vmatmul.f32.gmra.mxu0 %v93
  %v405 = vpop.f32.mrf.mxu0
  %v406 = vadd.f32 %v54, %v405
  %407 = vdwg.mxu0
  %408 = vmatpush.msra.mxu0 0.0
  %409 = vmatpush.msra.mxu0 0.0
  %410 = vmatpush.msra.mxu0 0.0
  %411 = vmatpush.msra.mxu0 0.0
  %412 = vmatpush.msra.mxu0 0.0
  %413 = vmatpush.msra.mxu0 0.0
  %414 = vmatpush.msra.mxu0 0.0
  %415 = vmatpush.msra.mxu0 0.0
  %416 = vmatpush.msra.mxu0 0.0
  %417 = vmatpush.msra.mxu0 0.0
  %418 = vmatpush.msra.mxu0 0.0
  %419 = vmatpush.msra.mxu0 0.0
  %420 = vmatpush.msra.mxu0 0.0
  %421 = vmatpush.msra.mxu0 0.0
  %422 = vmatpush.msra.mxu0 0.0
  %423 = vmatpush.msra.mxu0 %v124
  %424 = vmatmul.f32.gmra.mxu0 %v93
  %v425 = vpop.f32.mrf.mxu0
  %v426 = vadd.f32 %v54, %v425
  %427 = vdwg.mxu0
  %428 = vmatpush.msra.mxu0 0.0
  %429 = vmatpush.msra.mxu0 0.0
  %430 = vmatpush.msra.mxu0 0.0
  %431 = vmatpush.msra.mxu0 0.0
  %432 = vmatpush.msra.mxu0 0.0
  %433 = vmatpush.msra.mxu0 0.0
  %434 = vmatpush.msra.mxu0 0.0
  %435 = vmatpush.msra.mxu0 0.0
  %436 = vmatpush.msra.mxu0 0.0
  %437 = vmatpush.msra.mxu0 0.0
  %438 = vmatpush.msra.mxu0 0.0
  %439 = vmatpush.msra.mxu0 0.0
  %440 = vmatpush.msra.mxu0 0.0
  %441 = vmatpush.msra.mxu0 0.0
  %442 = vmatpush.msra.mxu0 0.0
  %443 = vmatpush.msra.mxu0 %v126
  %444 = vmatmul.f32.gmra.mxu0 %v93
  %v445 = vpop.f32.mrf.mxu0
  %v446 = vadd.f32 %v54, %v445
  %447 = vdwg.mxu0
  %vm448 = vcmp.gt.f32.partialorder %v146, 0.0
  %vm449 = vcmp.gt.f32.partialorder %v166, 0.0
  %vm450 = vcmp.gt.f32.partialorder %v186, 0.0
  %vm451 = vcmp.gt.f32.partialorder %v206, 0.0
  %vm452 = vcmp.gt.f32.partialorder %v226, 0.0
  %vm453 = vcmp.gt.f32.partialorder %v246, 0.0
  %vm454 = vcmp.gt.f32.partialorder %v266, 0.0
  %vm455 = vcmp.gt.f32.partialorder %v286, 0.0
  %vm456 = vcmp.gt.f32.partialorder %v306, 0.0
  %vm457 = vcmp.gt.f32.partialorder %v326, 0.0
  %vm458 = vcmp.gt.f32.partialorder %v346, 0.0
  %vm459 = vcmp.gt.f32.partialorder %v366, 0.0
  %vm460 = vcmp.gt.f32.partialorder %v386, 0.0
  %vm461 = vcmp.gt.f32.partialorder %v406, 0.0
  %vm462 = vcmp.gt.f32.partialorder %v426, 0.0
  %vm463 = vcmp.gt.f32.partialorder %v446, 0.0
  %v464 = vld [vmem:[%s3] sm:$0xf]
  %466 = vset.pattern.permute.xlu0 0
  %467 = vperm.xlu0 %466, %v464
  %v468 = vpop.permute.xlu0 %467
  %v470 = vmul.f32 %v146, %v468
  %v471 = vmul.f32 %v166, %v468
  %v472 = vmul.f32 %v186, %v468
  %v473 = vmul.f32 %v206, %v468
  %v474 = vmul.f32 %v226, %v468
  %v475 = vmul.f32 %v246, %v468
  %v476 = vmul.f32 %v266, %v468
  %v477 = vmul.f32 %v286, %v468
  %v478 = vmul.f32 %v306, %v468
  %v479 = vmul.f32 %v326, %v468
  %v480 = vmul.f32 %v346, %v468
  %v481 = vmul.f32 %v366, %v468
  %v482 = vmul.f32 %v386, %v468
  %v483 = vmul.f32 %v406, %v468
  %v484 = vmul.f32 %v426, %v468
  %v485 = vmul.f32 %v446, %v468
  %v486 = vsel %vm448, %v146, %v470
  %v487 = vsel %vm449, %v166, %v471
  %v488 = vsel %vm450, %v186, %v472
  %v489 = vsel %vm451, %v206, %v473
  %v490 = vsel %vm452, %v226, %v474
  %v491 = vsel %vm453, %v246, %v475
  %v492 = vsel %vm454, %v266, %v476
  %v493 = vsel %vm455, %v286, %v477
  %v494 = vsel %vm456, %v306, %v478
  %v495 = vsel %vm457, %v326, %v479
  %v496 = vsel %vm458, %v346, %v480
  %v497 = vsel %vm459, %v366, %v481
  %v498 = vsel %vm460, %v386, %v482
  %v499 = vsel %vm461, %v406, %v483
  %v500 = vsel %vm462, %v426, %v484
  %v501 = vsel %vm463, %v446, %v485
  %v502 = vld [vmem:[%s4] sm:$0xff]
  %s503 = scalar_lea.vmem %s4, 8
  %v504 = vld [vmem:[%s503] sm:$0xff]
  %v506 = vsel %vm91, %v504, 0
  %v509 = vsel %vm95, %v490, 0
  %v512 = vsel %vm95, %v491, 0
  %v515 = vsel %vm95, %v492, 0
  %v518 = vsel %vm95, %v493, 0
  %520 = vmatpush.msra.mxu0 0.0
  %521 = vmatpush.msra.mxu0 0.0
  %522 = vmatpush.msra.mxu0 0.0
  %523 = vmatpush.msra.mxu0 0.0
  %524 = vmatpush.msra.mxu0 0.0
  %525 = vmatpush.msra.mxu0 0.0
  %526 = vmatpush.msra.mxu0 0.0
  %527 = vmatpush.msra.mxu0 0.0
  %528 = vmatpush.msra.mxu0 0.0
  %529 = vmatpush.msra.mxu0 0.0
  %530 = vmatpush.msra.mxu0 0.0
  %531 = vmatpush.msra.mxu0 0.0
  %532 = vmatpush.msra.mxu0 0.0
  %533 = vmatpush.msra.mxu0 0.0
  %534 = vmatpush.msra.mxu0 0.0
  %535 = vmatpush.msra.mxu0 %v509
  %536 = vmatmul.f32.gmra.mxu0 %v506
  %v537 = vpop.f32.mrf.mxu0
  %v538 = vadd.f32 0.0, %v537
  %539 = vdwg.mxu0
  %540 = vmatpush.msra.mxu0 0.0
  %541 = vmatpush.msra.mxu0 0.0
  %542 = vmatpush.msra.mxu0 0.0
  %543 = vmatpush.msra.mxu0 0.0
  %544 = vmatpush.msra.mxu0 0.0
  %545 = vmatpush.msra.mxu0 0.0
  %546 = vmatpush.msra.mxu0 0.0
  %547 = vmatpush.msra.mxu0 0.0
  %548 = vmatpush.msra.mxu0 0.0
  %549 = vmatpush.msra.mxu0 0.0
  %550 = vmatpush.msra.mxu0 0.0
  %551 = vmatpush.msra.mxu0 0.0
  %552 = vmatpush.msra.mxu0 0.0
  %553 = vmatpush.msra.mxu0 0.0
  %554 = vmatpush.msra.mxu0 0.0
  %555 = vmatpush.msra.mxu0 %v512
  %556 = vmatmul.f32.gmra.mxu0 %v506
  %v557 = vpop.f32.mrf.mxu0
  %v558 = vadd.f32 0.0, %v557
  %559 = vdwg.mxu0
  %560 = vmatpush.msra.mxu0 0.0
  %561 = vmatpush.msra.mxu0 0.0
  %562 = vmatpush.msra.mxu0 0.0
  %563 = vmatpush.msra.mxu0 0.0
  %564 = vmatpush.msra.mxu0 0.0
  %565 = vmatpush.msra.mxu0 0.0
  %566 = vmatpush.msra.mxu0 0.0
  %567 = vmatpush.msra.mxu0 0.0
  %568 = vmatpush.msra.mxu0 0.0
  %569 = vmatpush.msra.mxu0 0.0
  %570 = vmatpush.msra.mxu0 0.0
  %571 = vmatpush.msra.mxu0 0.0
  %572 = vmatpush.msra.mxu0 0.0
  %573 = vmatpush.msra.mxu0 0.0
  %574 = vmatpush.msra.mxu0 0.0
  %575 = vmatpush.msra.mxu0 %v515
  %576 = vmatmul.f32.gmra.mxu0 %v506
  %v577 = vpop.f32.mrf.mxu0
  %v578 = vadd.f32 0.0, %v577
  %579 = vdwg.mxu0
  %580 = vmatpush.msra.mxu0 0.0
  %581 = vmatpush.msra.mxu0 0.0
  %582 = vmatpush.msra.mxu0 0.0
  %583 = vmatpush.msra.mxu0 0.0
  %584 = vmatpush.msra.mxu0 0.0
  %585 = vmatpush.msra.mxu0 0.0
  %586 = vmatpush.msra.mxu0 0.0
  %587 = vmatpush.msra.mxu0 0.0
  %588 = vmatpush.msra.mxu0 0.0
  %589 = vmatpush.msra.mxu0 0.0
  %590 = vmatpush.msra.mxu0 0.0
  %591 = vmatpush.msra.mxu0 0.0
  %592 = vmatpush.msra.mxu0 0.0
  %593 = vmatpush.msra.mxu0 0.0
  %594 = vmatpush.msra.mxu0 0.0
  %595 = vmatpush.msra.mxu0 %v518
  %596 = vmatmul.f32.gmra.mxu0 %v506
  %v597 = vpop.f32.mrf.mxu0
  %v598 = vadd.f32 0.0, %v597
  %599 = vdwg.mxu0
  %v601 = vsel %vm91, %v502, 0
  %v604 = vsel %vm95, %v486, 0
  %v607 = vsel %vm95, %v487, 0
  %v610 = vsel %vm95, %v488, 0
  %v613 = vsel %vm95, %v489, 0
  %615 = vmatpush.msra.mxu0 0.0
  %616 = vmatpush.msra.mxu0 0.0
  %617 = vmatpush.msra.mxu0 0.0
  %618 = vmatpush.msra.mxu0 0.0
  %619 = vmatpush.msra.mxu0 0.0
  %620 = vmatpush.msra.mxu0 0.0
  %621 = vmatpush.msra.mxu0 0.0
  %622 = vmatpush.msra.mxu0 0.0
  %623 = vmatpush.msra.mxu0 0.0
  %624 = vmatpush.msra.mxu0 0.0
  %625 = vmatpush.msra.mxu0 0.0
  %626 = vmatpush.msra.mxu0 0.0
  %627 = vmatpush.msra.mxu0 0.0
  %628 = vmatpush.msra.mxu0 0.0
  %629 = vmatpush.msra.mxu0 0.0
  %630 = vmatpush.msra.mxu0 %v604
  %631 = vmatmul.f32.gmra.mxu0 %v601
  %v632 = vpop.f32.mrf.mxu0
  %v633 = vadd.f32 %v538, %v632
  %634 = vdwg.mxu0
  %635 = vmatpush.msra.mxu0 0.0
  %636 = vmatpush.msra.mxu0 0.0
  %637 = vmatpush.msra.mxu0 0.0
  %638 = vmatpush.msra.mxu0 0.0
  %639 = vmatpush.msra.mxu0 0.0
  %640 = vmatpush.msra.mxu0 0.0
  %641 = vmatpush.msra.mxu0 0.0
  %642 = vmatpush.msra.mxu0 0.0
  %643 = vmatpush.msra.mxu0 0.0
  %644 = vmatpush.msra.mxu0 0.0
  %645 = vmatpush.msra.mxu0 0.0
  %646 = vmatpush.msra.mxu0 0.0
  %647 = vmatpush.msra.mxu0 0.0
  %648 = vmatpush.msra.mxu0 0.0
  %649 = vmatpush.msra.mxu0 0.0
  %650 = vmatpush.msra.mxu0 %v607
  %651 = vmatmul.f32.gmra.mxu0 %v601
  %v652 = vpop.f32.mrf.mxu0
  %v653 = vadd.f32 %v558, %v652
  %654 = vdwg.mxu0
  %655 = vmatpush.msra.mxu0 0.0
  %656 = vmatpush.msra.mxu0 0.0
  %657 = vmatpush.msra.mxu0 0.0
  %658 = vmatpush.msra.mxu0 0.0
  %659 = vmatpush.msra.mxu0 0.0
  %660 = vmatpush.msra.mxu0 0.0
  %661 = vmatpush.msra.mxu0 0.0
  %662 = vmatpush.msra.mxu0 0.0
  %663 = vmatpush.msra.mxu0 0.0
  %664 = vmatpush.msra.mxu0 0.0
  %665 = vmatpush.msra.mxu0 0.0
  %666 = vmatpush.msra.mxu0 0.0
  %667 = vmatpush.msra.mxu0 0.0
  %668 = vmatpush.msra.mxu0 0.0
  %669 = vmatpush.msra.mxu0 0.0
  %670 = vmatpush.msra.mxu0 %v610
  %671 = vmatmul.f32.gmra.mxu0 %v601
  %v672 = vpop.f32.mrf.mxu0
  %v673 = vadd.f32 %v578, %v672
  %674 = vdwg.mxu0
  %675 = vmatpush.msra.mxu0 0.0
  %676 = vmatpush.msra.mxu0 0.0
  %677 = vmatpush.msra.mxu0 0.0
  %678 = vmatpush.msra.mxu0 0.0
  %679 = vmatpush.msra.mxu0 0.0
  %680 = vmatpush.msra.mxu0 0.0
  %681 = vmatpush.msra.mxu0 0.0
  %682 = vmatpush.msra.mxu0 0.0
  %683 = vmatpush.msra.mxu0 0.0
  %684 = vmatpush.msra.mxu0 0.0
  %685 = vmatpush.msra.mxu0 0.0
  %686 = vmatpush.msra.mxu0 0.0
  %687 = vmatpush.msra.mxu0 0.0
  %688 = vmatpush.msra.mxu0 0.0
  %689 = vmatpush.msra.mxu0 0.0
  %690 = vmatpush.msra.mxu0 %v613
  %691 = vmatmul.f32.gmra.mxu0 %v601
  %v692 = vpop.f32.mrf.mxu0
  %v693 = vadd.f32 %v598, %v692
  %694 = vdwg.mxu0
  %s695 = scalar_lea.vmem %s4, 16
  %v696 = vld [vmem:[%s695] sm:$0xff]
  %v698 = vsel %vm91, %v696, 0
  %v701 = vsel %vm95, %v494, 0
  %v704 = vsel %vm95, %v495, 0
  %v707 = vsel %vm95, %v496, 0
  %v710 = vsel %vm95, %v497, 0
  %712 = vmatpush.msra.mxu0 0.0
  %713 = vmatpush.msra.mxu0 0.0
  %714 = vmatpush.msra.mxu0 0.0
  %715 = vmatpush.msra.mxu0 0.0
  %716 = vmatpush.msra.mxu0 0.0
  %717 = vmatpush.msra.mxu0 0.0
  %718 = vmatpush.msra.mxu0 0.0
  %719 = vmatpush.msra.mxu0 0.0
  %720 = vmatpush.msra.mxu0 0.0
  %721 = vmatpush.msra.mxu0 0.0
  %722 = vmatpush.msra.mxu0 0.0
  %723 = vmatpush.msra.mxu0 0.0
  %724 = vmatpush.msra.mxu0 0.0
  %725 = vmatpush.msra.mxu0 0.0
  %726 = vmatpush.msra.mxu0 0.0
  %727 = vmatpush.msra.mxu0 %v701
  %728 = vmatmul.f32.gmra.mxu0 %v698
  %v729 = vpop.f32.mrf.mxu0
  %v730 = vadd.f32 0.0, %v729
  %731 = vdwg.mxu0
  %732 = vmatpush.msra.mxu0 0.0
  %733 = vmatpush.msra.mxu0 0.0
  %734 = vmatpush.msra.mxu0 0.0
  %735 = vmatpush.msra.mxu0 0.0
  %736 = vmatpush.msra.mxu0 0.0
  %737 = vmatpush.msra.mxu0 0.0
  %738 = vmatpush.msra.mxu0 0.0
  %739 = vmatpush.msra.mxu0 0.0
  %740 = vmatpush.msra.mxu0 0.0
  %741 = vmatpush.msra.mxu0 0.0
  %742 = vmatpush.msra.mxu0 0.0
  %743 = vmatpush.msra.mxu0 0.0
  %744 = vmatpush.msra.mxu0 0.0
  %745 = vmatpush.msra.mxu0 0.0
  %746 = vmatpush.msra.mxu0 0.0
  %747 = vmatpush.msra.mxu0 %v704
  %748 = vmatmul.f32.gmra.mxu0 %v698
  %v749 = vpop.f32.mrf.mxu0
  %v750 = vadd.f32 0.0, %v749
  %751 = vdwg.mxu0
  %752 = vmatpush.msra.mxu0 0.0
  %753 = vmatpush.msra.mxu0 0.0
  %754 = vmatpush.msra.mxu0 0.0
  %755 = vmatpush.msra.mxu0 0.0
  %756 = vmatpush.msra.mxu0 0.0
  %757 = vmatpush.msra.mxu0 0.0
  %758 = vmatpush.msra.mxu0 0.0
  %759 = vmatpush.msra.mxu0 0.0
  %760 = vmatpush.msra.mxu0 0.0
  %761 = vmatpush.msra.mxu0 0.0
  %762 = vmatpush.msra.mxu0 0.0
  %763 = vmatpush.msra.mxu0 0.0
  %764 = vmatpush.msra.mxu0 0.0
  %765 = vmatpush.msra.mxu0 0.0
  %766 = vmatpush.msra.mxu0 0.0
  %767 = vmatpush.msra.mxu0 %v707
  %768 = vmatmul.f32.gmra.mxu0 %v698
  %v769 = vpop.f32.mrf.mxu0
  %v770 = vadd.f32 0.0, %v769
  %771 = vdwg.mxu0
  %772 = vmatpush.msra.mxu0 0.0
  %773 = vmatpush.msra.mxu0 0.0
  %774 = vmatpush.msra.mxu0 0.0
  %775 = vmatpush.msra.mxu0 0.0
  %776 = vmatpush.msra.mxu0 0.0
  %777 = vmatpush.msra.mxu0 0.0
  %778 = vmatpush.msra.mxu0 0.0
  %779 = vmatpush.msra.mxu0 0.0
  %780 = vmatpush.msra.mxu0 0.0
  %781 = vmatpush.msra.mxu0 0.0
  %782 = vmatpush.msra.mxu0 0.0
  %783 = vmatpush.msra.mxu0 0.0
  %784 = vmatpush.msra.mxu0 0.0
  %785 = vmatpush.msra.mxu0 0.0
  %786 = vmatpush.msra.mxu0 0.0
  %787 = vmatpush.msra.mxu0 %v710
  %788 = vmatmul.f32.gmra.mxu0 %v698
  %v789 = vpop.f32.mrf.mxu0
  %v790 = vadd.f32 0.0, %v789
  %791 = vdwg.mxu0
  %v792 = vadd.f32 %v633, %v730
  %v793 = vadd.f32 %v653, %v750
  %v794 = vadd.f32 %v673, %v770
  %v795 = vadd.f32 %v693, %v790
  %s796 = scalar_lea.vmem %s4, 24
  %v797 = vld [vmem:[%s796] sm:$0xff]
  %v799 = vsel %vm91, %v797, 0
  %v802 = vsel %vm95, %v498, 0
  %v805 = vsel %vm95, %v499, 0
  %v808 = vsel %vm95, %v500, 0
  %v811 = vsel %vm95, %v501, 0
  %813 = vmatpush.msra.mxu0 0.0
  %814 = vmatpush.msra.mxu0 0.0
  %815 = vmatpush.msra.mxu0 0.0
  %816 = vmatpush.msra.mxu0 0.0
  %817 = vmatpush.msra.mxu0 0.0
  %818 = vmatpush.msra.mxu0 0.0
  %819 = vmatpush.msra.mxu0 0.0
  %820 = vmatpush.msra.mxu0 0.0
  %821 = vmatpush.msra.mxu0 0.0
  %822 = vmatpush.msra.mxu0 0.0
  %823 = vmatpush.msra.mxu0 0.0
  %824 = vmatpush.msra.mxu0 0.0
  %825 = vmatpush.msra.mxu0 0.0
  %826 = vmatpush.msra.mxu0 0.0
  %827 = vmatpush.msra.mxu0 0.0
  %828 = vmatpush.msra.mxu0 %v802
  %829 = vmatmul.f32.gmra.mxu0 %v799
  %v830 = vpop.f32.mrf.mxu0
  %v831 = vadd.f32 0.0, %v830
  %832 = vdwg.mxu0
  %833 = vmatpush.msra.mxu0 0.0
  %834 = vmatpush.msra.mxu0 0.0
  %835 = vmatpush.msra.mxu0 0.0
  %836 = vmatpush.msra.mxu0 0.0
  %837 = vmatpush.msra.mxu0 0.0
  %838 = vmatpush.msra.mxu0 0.0
  %839 = vmatpush.msra.mxu0 0.0
  %840 = vmatpush.msra.mxu0 0.0
  %841 = vmatpush.msra.mxu0 0.0
  %842 = vmatpush.msra.mxu0 0.0
  %843 = vmatpush.msra.mxu0 0.0
  %844 = vmatpush.msra.mxu0 0.0
  %845 = vmatpush.msra.mxu0 0.0
  %846 = vmatpush.msra.mxu0 0.0
  %847 = vmatpush.msra.mxu0 0.0
  %848 = vmatpush.msra.mxu0 %v805
  %849 = vmatmul.f32.gmra.mxu0 %v799
  %v850 = vpop.f32.mrf.mxu0
  %v851 = vadd.f32 0.0, %v850
  %852 = vdwg.mxu0
  %853 = vmatpush.msra.mxu0 0.0
  %854 = vmatpush.msra.mxu0 0.0
  %855 = vmatpush.msra.mxu0 0.0
  %856 = vmatpush.msra.mxu0 0.0
  %857 = vmatpush.msra.mxu0 0.0
  %858 = vmatpush.msra.mxu0 0.0
  %859 = vmatpush.msra.mxu0 0.0
  %860 = vmatpush.msra.mxu0 0.0
  %861 = vmatpush.msra.mxu0 0.0
  %862 = vmatpush.msra.mxu0 0.0
  %863 = vmatpush.msra.mxu0 0.0
  %864 = vmatpush.msra.mxu0 0.0
  %865 = vmatpush.msra.mxu0 0.0
  %866 = vmatpush.msra.mxu0 0.0
  %867 = vmatpush.msra.mxu0 0.0
  %868 = vmatpush.msra.mxu0 %v808
  %869 = vmatmul.f32.gmra.mxu0 %v799
  %v870 = vpop.f32.mrf.mxu0
  %v871 = vadd.f32 0.0, %v870
  %872 = vdwg.mxu0
  %873 = vmatpush.msra.mxu0 0.0
  %874 = vmatpush.msra.mxu0 0.0
  %875 = vmatpush.msra.mxu0 0.0
  %876 = vmatpush.msra.mxu0 0.0
  %877 = vmatpush.msra.mxu0 0.0
  %878 = vmatpush.msra.mxu0 0.0
  %879 = vmatpush.msra.mxu0 0.0
  %880 = vmatpush.msra.mxu0 0.0
  %881 = vmatpush.msra.mxu0 0.0
  %882 = vmatpush.msra.mxu0 0.0
  %883 = vmatpush.msra.mxu0 0.0
  %884 = vmatpush.msra.mxu0 0.0
  %885 = vmatpush.msra.mxu0 0.0
  %886 = vmatpush.msra.mxu0 0.0
  %887 = vmatpush.msra.mxu0 0.0
  %888 = vmatpush.msra.mxu0 %v811
  %889 = vmatmul.f32.gmra.mxu0 %v799
  %v890 = vpop.f32.mrf.mxu0
  %v891 = vadd.f32 0.0, %v890
  %892 = vdwg.mxu0
  %v893 = vadd.f32 %v792, %v831
  %v894 = vadd.f32 %v793, %v851
  %v895 = vadd.f32 %v794, %v871
  %v896 = vadd.f32 %v795, %v891
  %v897 = vld [vmem:[%s5] sm:$0xff]
  %899 = vset.pattern.permute.xlu0 0
  %900 = vperm.xlu0 %899, %v897
  %v901 = vpop.permute.xlu0 %900
  %v903 = vadd.f32 %v893, %v901
  %v904 = vadd.f32 %v894, %v901
  %v905 = vadd.f32 %v895, %v901
  %v906 = vadd.f32 %v896, %v901
  %vm907 = vcmp.gt.f32.partialorder %v903, 0.0
  %vm908 = vcmp.gt.f32.partialorder %v904, 0.0
  %vm909 = vcmp.gt.f32.partialorder %v905, 0.0
  %vm910 = vcmp.gt.f32.partialorder %v906, 0.0
  %v911 = vld [vmem:[%s6] sm:$0xff]
  %913 = vset.pattern.permute.xlu0 0
  %914 = vperm.xlu0 %913, %v911
  %v915 = vpop.permute.xlu0 %914
  %v917 = vmul.f32 %v903, %v915
  %v918 = vmul.f32 %v904, %v915
  %v919 = vmul.f32 %v905, %v915
  %v920 = vmul.f32 %v906, %v915
  %v921 = vsel %vm907, %v903, %v917
  %v922 = vsel %vm908, %v904, %v918
  %v923 = vsel %vm909, %v905, %v919
  %v924 = vsel %vm910, %v906, %v920
  %v925 = vld [vmem:[%s7] sm:$0xff]
  %s926 = scalar_lea.vmem %s7, 8
  %v927 = vld [vmem:[%s926] sm:$0xff]
  %vm928 = vcmask 64512
  %v930 = vsel %vm928, %v927, 0
  %932 = vmatpush.msra.mxu0 0.0
  %933 = vmatpush.msra.mxu0 0.0
  %934 = vmatpush.msra.mxu0 0.0
  %935 = vmatpush.msra.mxu0 0.0
  %936 = vmatpush.msra.mxu0 0.0
  %937 = vmatpush.msra.mxu0 0.0
  %938 = vmatpush.msra.mxu0 0.0
  %939 = vmatpush.msra.mxu0 0.0
  %940 = vmatpush.msra.mxu0 0.0
  %941 = vmatpush.msra.mxu0 0.0
  %942 = vmatpush.msra.mxu0 0.0
  %943 = vmatpush.msra.mxu0 0.0
  %944 = vmatpush.msra.mxu0 0.0
  %945 = vmatpush.msra.mxu0 0.0
  %946 = vmatpush.msra.mxu0 0.0
  %947 = vmatpush.msra.mxu0 %v922
  %948 = vmatmul.f32.gmra.mxu0 %v930
  %v949 = vpop.f32.mrf.mxu0
  %v950 = vadd.f32 0.0, %v949
  %951 = vdwg.mxu0
  %v953 = vsel %vm928, %v925, 0
  %955 = vmatpush.msra.mxu0 0.0
  %956 = vmatpush.msra.mxu0 0.0
  %957 = vmatpush.msra.mxu0 0.0
  %958 = vmatpush.msra.mxu0 0.0
  %959 = vmatpush.msra.mxu0 0.0
  %960 = vmatpush.msra.mxu0 0.0
  %961 = vmatpush.msra.mxu0 0.0
  %962 = vmatpush.msra.mxu0 0.0
  %963 = vmatpush.msra.mxu0 0.0
  %964 = vmatpush.msra.mxu0 0.0
  %965 = vmatpush.msra.mxu0 0.0
  %966 = vmatpush.msra.mxu0 0.0
  %967 = vmatpush.msra.mxu0 0.0
  %968 = vmatpush.msra.mxu0 0.0
  %969 = vmatpush.msra.mxu0 0.0
  %970 = vmatpush.msra.mxu0 %v921
  %971 = vmatmul.f32.gmra.mxu0 %v953
  %v972 = vpop.f32.mrf.mxu0
  %v973 = vadd.f32 %v950, %v972
  %974 = vdwg.mxu0
  %s975 = scalar_lea.vmem %s7, 16
  %v976 = vld [vmem:[%s975] sm:$0xff]
  %v978 = vsel %vm928, %v976, 0
  %980 = vmatpush.msra.mxu0 0.0
  %981 = vmatpush.msra.mxu0 0.0
  %982 = vmatpush.msra.mxu0 0.0
  %983 = vmatpush.msra.mxu0 0.0
  %984 = vmatpush.msra.mxu0 0.0
  %985 = vmatpush.msra.mxu0 0.0
  %986 = vmatpush.msra.mxu0 0.0
  %987 = vmatpush.msra.mxu0 0.0
  %988 = vmatpush.msra.mxu0 0.0
  %989 = vmatpush.msra.mxu0 0.0
  %990 = vmatpush.msra.mxu0 0.0
  %991 = vmatpush.msra.mxu0 0.0
  %992 = vmatpush.msra.mxu0 0.0
  %993 = vmatpush.msra.mxu0 0.0
  %994 = vmatpush.msra.mxu0 0.0
  %995 = vmatpush.msra.mxu0 %v923
  %996 = vmatmul.f32.gmra.mxu0 %v978
  %v997 = vpop.f32.mrf.mxu0
  %v998 = vadd.f32 0.0, %v997
  %999 = vdwg.mxu0
  %v1000 = vadd.f32 %v973, %v998
  %s1001 = scalar_lea.vmem %s7, 24
  %v1002 = vld [vmem:[%s1001] sm:$0xff]
  %v1004 = vsel %vm928, %v1002, 0
  %1006 = vmatpush.msra.mxu0 0.0
  %1007 = vmatpush.msra.mxu0 0.0
  %1008 = vmatpush.msra.mxu0 0.0
  %1009 = vmatpush.msra.mxu0 0.0
  %1010 = vmatpush.msra.mxu0 0.0
  %1011 = vmatpush.msra.mxu0 0.0
  %1012 = vmatpush.msra.mxu0 0.0
  %1013 = vmatpush.msra.mxu0 0.0
  %1014 = vmatpush.msra.mxu0 0.0
  %1015 = vmatpush.msra.mxu0 0.0
  %1016 = vmatpush.msra.mxu0 0.0
  %1017 = vmatpush.msra.mxu0 0.0
  %1018 = vmatpush.msra.mxu0 0.0
  %1019 = vmatpush.msra.mxu0 0.0
  %1020 = vmatpush.msra.mxu0 0.0
  %1021 = vmatpush.msra.mxu0 %v924
  %1022 = vmatmul.f32.gmra.mxu0 %v1004
  %v1023 = vpop.f32.mrf.mxu0
  %v1024 = vadd.f32 0.0, %v1023
  %1025 = vdwg.mxu0
  %v1026 = vadd.f32 %v1000, %v1024
  %v1027 = vld [vmem:[%s8] sm:$0xff]
  %1029 = vset.pattern.permute.xlu0 0
  %1030 = vperm.xlu0 %1029, %v1027
  %v1031 = vpop.permute.xlu0 %1030
  %v1033 = vadd.f32 %v1026, %v1031
  %vm1034 = vcmp.gt.f32.partialorder %v1033, 0.0
  %v1035 = vld [vmem:[%s9] sm:$0xff]
  %1037 = vset.pattern.permute.xlu0 0
  %1038 = vperm.xlu0 %1037, %v1035
  %v1039 = vpop.permute.xlu0 %1038
  %v1041 = vmul.f32 %v1033, %v1039
  %v1042 = vsel %vm1034, %v1033, %v1041
  %v1043 = vld [vmem:[%s10] sm:$0xff]
  %v1044 = vld [vmem:[%s11] sm:$0xff]
  %1046 = vset.pattern.permute.xlu0 0
  %1047 = vperm.xlu0 %1046, %v1044
  %v1048 = vpop.permute.xlu0 %1047
  %v1051 = vsel %vm928, %v1043, 0
  %1053 = vmatpush.msra.mxu0 0.0
  %1054 = vmatpush.msra.mxu0 0.0
  %1055 = vmatpush.msra.mxu0 0.0
  %1056 = vmatpush.msra.mxu0 0.0
  %1057 = vmatpush.msra.mxu0 0.0
  %1058 = vmatpush.msra.mxu0 0.0
  %1059 = vmatpush.msra.mxu0 0.0
  %1060 = vmatpush.msra.mxu0 0.0
  %1061 = vmatpush.msra.mxu0 0.0
  %1062 = vmatpush.msra.mxu0 0.0
  %1063 = vmatpush.msra.mxu0 0.0
  %1064 = vmatpush.msra.mxu0 0.0
  %1065 = vmatpush.msra.mxu0 0.0
  %1066 = vmatpush.msra.mxu0 0.0
  %1067 = vmatpush.msra.mxu0 0.0
  %1068 = vmatpush.msra.mxu0 %v1042
  %1069 = vmatmul.f32.gmra.mxu0 %v1051
  %v1070 = vpop.f32.mrf.mxu0
  %v1071 = vadd.f32 %v1048, %v1070
  %1072 = vdwg.mxu0
  %1073 = vst [vmem:[%s12] sm:$0xff] %v1071
  // Predicated region
  $region50: #{hyper_encoder_pallas.1} parent=0 // pred_check
    _
  $region51: #{hyper_encoder_pallas.1} parent=0 // pred_check_branch
    %1075 = sbr.rel (0) target = $region53
  $region52: #{hyper_encoder_pallas.1} parent=0 // pred_region
    _
  $region53: #{hyper_encoder_pallas.1} parent=0 // pred_fallthru
    _
  // Predicated region
  $region54: #{hyper_encoder_pallas.1} parent=0 // pred_check
    _
  $region55: #{hyper_encoder_pallas.1} parent=0 // pred_check_branch
    %1077 = sbr.rel (0) target = $region57
  $region56: #{hyper_encoder_pallas.1} parent=0 // pred_region
    _
  $region57: #{hyper_encoder_pallas.1} parent=0 // pred_fallthru
    _

</llo_original>
